<compile_context>
chip_gen: v6e
topology: v6e:2x2x1
jax: 0.10.0
libtpu: 0.0.40
codegen_flags: <defaults>
</compile_context>

<pallas_src>
from functools import partial

import jax
import jax.numpy as jnp
from jax.experimental import pallas as pl
from jax.experimental.pallas import tpu as pltpu

_LANE = 128  # minimum lane-dense last dim


def _round_up(v: int, m: int) -> int:
    return ((v + m - 1) // m) * m


def _packed_sublane(dtype) -> int:
    """Native packed sublane tile: 8 rows for 32-bit, 16 for bf16, 32 for int8/fp8."""
    itemsize = jnp.dtype(dtype).itemsize
    return 8 * max(1, 4 // itemsize)


def _chip_kind() -> str:
    try:
        return jax.devices()[0].device_kind.lower()
    except Exception:  # no TPU visible at trace time; use conservative defaults
        return ""


def _clamp_kernel(x_ref, o_ref, *, min_val, max_val):
    x = x_ref[...]
    lo = jnp.asarray(min_val, dtype=x.dtype)
    hi = jnp.asarray(max_val, dtype=x.dtype)
    o_ref[...] = jnp.minimum(jnp.maximum(x, lo), hi)


def _clamp_2d(x2d: jax.Array, min_val: float, max_val: float) -> jax.Array:
    """Run the clamp kernel over a (rows, lane) lane-dense slab."""
    rows, lane = x2d.shape
    itemsize = jnp.dtype(x2d.dtype).itemsize
    sublane_tile = _packed_sublane(x2d.dtype)
    bytes_per_row = lane * itemsize

    kind = _chip_kind()
    is_v7 = "v7" in kind  # 2 TensorCores/chip, 64 MiB VMEM per TC
    target_block_bytes = (4 if is_v7 else 6) * 1024 * 1024
    vmem_limit_bytes = (40 if is_v7 else 64) * 1024 * 1024

    if rows <= sublane_tile:
        tile_rows = rows  # tiny input: one full-extent block
    else:
        # ~target_block_bytes per block, rounded to the packed sublane tile.
        tile_rows = max(
            sublane_tile,
            (target_block_bytes // bytes_per_row) // sublane_tile * sublane_tile,
        )
        if is_v7:
            # Keep >= 8 grid steps (>= 4 per TensorCore) when blocks stay
            # reasonably big, so both cores get work and the prefetch /
            # writeback pipeline is actually hidden; otherwise fall back to
            # a half-split (one block per core).
            steps = -(-rows // tile_rows)
            if steps < 8:
                cand8 = _round_up(-(-rows // 8), sublane_tile)
                if cand8 * bytes_per_row >= 512 * 1024:
                    tile_rows = min(tile_rows, cand8)
                elif steps < 2:
                    cand2 = _round_up(-(-rows // 2), sublane_tile)
                    tile_rows = min(tile_rows, max(cand2, sublane_tile))
        if tile_rows >= rows:
            tile_rows = rows  # full-extent block is always legal

    grid = (pl.cdiv(rows, tile_rows),)
    n_elems = rows * lane
    cost = pl.CostEstimate(
        flops=2 * n_elems,
        transcendentals=0,
        bytes_accessed=2 * n_elems * itemsize,
    )

    kernel = partial(_clamp_kernel, min_val=min_val, max_val=max_val)

    return pl.pallas_call(
        kernel,
        out_shape=jax.ShapeDtypeStruct((rows, lane), x2d.dtype),
        grid_spec=pltpu.PrefetchScalarGridSpec(
            num_scalar_prefetch=0,
            grid=grid,
            in_specs=[pl.BlockSpec((tile_rows, lane), lambda i: (i, 0))],
            out_specs=pl.BlockSpec((tile_rows, lane), lambda i: (i, 0)),
        ),
        compiler_params=pltpu.CompilerParams(
            dimension_semantics=("parallel",),
            vmem_limit_bytes=vmem_limit_bytes,
        ),
        cost_estimate=cost,
    )(x2d)


def min_max_chop(image: jax.Array, min_val: float = 0.0, max_val: float = 1.0) -> jax.Array:
    """Elementwise clamp(image, min_val, max_val), matching torch.clamp semantics."""
    orig_shape = image.shape
    dtype = image.dtype
    flat = image.reshape(-1)
    n = flat.shape[0]

    lo = jnp.asarray(min_val, dtype=dtype)
    hi = jnp.asarray(max_val, dtype=dtype)

    if n < _LANE:
        # Smaller than one lane; not worth a kernel launch.
        return jnp.minimum(jnp.maximum(flat, lo), hi).reshape(orig_shape)

    # Widest lane-dense last dim that divides n (longer unmasked vld/vst runs).
    lane = _LANE
    for cand in (1024, 512, 256):
        if n % cand == 0:
            lane = cand
            break

    n_main = (n // lane) * lane
    tail = n - n_main

    if tail == 0:
        # Fast path (typical NCHW image sizes): no pad, no slice, no concat.
        main2d = flat.reshape(n // lane, lane)
        return _clamp_2d(main2d, min_val, max_val).reshape(orig_shape)

    # Ragged tail (< 128 elements): clamp it outside the kernel and stitch.
    # TODO(synk): fold the tail into the kernel (masked boundary-block store)
    # to avoid the extra HBM round trip from the concat; ragged element counts
    # are rare for image tensors.
    main2d = flat[:n_main].reshape(n_main // lane, lane)
    main_out = _clamp_2d(main2d, min_val, max_val).reshape(-1)
    tail_out = jnp.minimum(jnp.maximum(flat[n_main:], lo), hi)
    return jnp.concatenate([main_out, tail_out]).reshape(orig_shape)


if __name__ == "__main__":
    key = jax.random.PRNGKey(0)

    # NCHW input, values spread beyond [0, 1] so the clamp is exercised.
    x = jax.random.normal(key, (2, 4, 16, 16), dtype=jnp.float32) * 2.0
    y = jax.block_until_ready(min_max_chop(x, min_val=0.0, max_val=1.0))
    y_ref = jnp.clip(x, 0.0, 1.0)
    assert y.shape == x.shape and y.dtype == x.dtype
    assert jnp.allclose(y, y_ref), "mismatch vs reference clamp"

    # bf16 input exercises the dtype-aware (16-row) sublane rounding.
    xb = (jax.random.normal(key, (4, 8, 32, 32), dtype=jnp.float32) * 2.0).astype(jnp.bfloat16)
    yb = jax.block_until_ready(min_max_chop(xb, 0.0, 1.0))
    assert jnp.allclose(yb.astype(jnp.float32),
                        jnp.clip(xb.astype(jnp.float32), 0.0, 1.0)), "bf16 mismatch"

    # Ragged sizes: one below a single lane, one with a sub-128 tail.
    x2 = jax.random.normal(key, (3, 5, 7), dtype=jnp.float32) * 2.0
    y2 = jax.block_until_ready(min_max_chop(x2, 0.0, 1.0))
    assert jnp.allclose(y2, jnp.clip(x2, 0.0, 1.0)), "mismatch on tiny ragged size"

    x3 = jax.random.normal(key, (3, 5, 11), dtype=jnp.float32) * 2.0
    y3 = jax.block_until_ready(min_max_chop(x3, 0.0, 1.0))
    assert jnp.allclose(y3, jnp.clip(x3, 0.0, 1.0)), "mismatch on ragged-tail size"

    print("KERNEL_OK")
</pallas_src>

<mosaic_0001>
module attributes {stable_mosaic.version = 11 : i64} {
  func.func @_clamp_kernel(%arg0: i32, %arg1: memref<2x1024xf32, #tpu.memory_space<vmem>>, %arg2: memref<2x1024xf32, #tpu.memory_space<vmem>>) attributes {dimension_semantics = [#tpu.dimension_semantics<parallel>], iteration_bounds = array<i64: 1>, scalar_prefetch = 0 : i64, scratch_operands = 0 : i64, tpu.core_type = #tpu.core_type<tc>, window_params = [{transform_indices = @transform_0, window_bounds = array<i64: 2, 1024>}, {transform_indices = @transform_1, window_bounds = array<i64: 2, 1024>}]} {
    %c0 = arith.constant 0 : index
    %c0_0 = arith.constant 0 : index
    %0 = vector.load %arg1[%c0, %c0_0] : memref<2x1024xf32, #tpu.memory_space<vmem>>, vector<2x1024xf32>
    %cst = arith.constant 0.000000e+00 : f32
    %1 = vector.broadcast %cst : f32 to vector<2x1024xf32>
    %2 = arith.maximumf %0, %1 : vector<2x1024xf32>
    %cst_1 = arith.constant 1.000000e+00 : f32
    %3 = vector.broadcast %cst_1 : f32 to vector<2x1024xf32>
    %4 = arith.minimumf %2, %3 : vector<2x1024xf32>
    %c0_2 = arith.constant 0 : index
    %c0_3 = arith.constant 0 : index
    %5 = vector.load %arg2[%c0_2, %c0_3] : memref<2x1024xf32, #tpu.memory_space<vmem>>, vector<2x1024xf32>
    tpu.vector_store %arg2[%c0_2, %c0_3], %4 {strides = array<i32>} : memref<2x1024xf32, #tpu.memory_space<vmem>>, vector<2x1024xf32>,
    return
  }
  func.func @transform_0(%arg0: i32) -> (i32, i32) {
    %c0_i32 = arith.constant 0 : i32
    %c0_i32_0 = arith.constant 0 : i32
    return %arg0, %c0_i32 : i32, i32
  }
  func.func @transform_1(%arg0: i32) -> (i32, i32) {
    %c0_i32 = arith.constant 0 : i32
    %c0_i32_0 = arith.constant 0 : i32
    return %arg0, %c0_i32 : i32, i32
  }
}

</mosaic_0001>

<llo_original>
// kernel: tpu_custom_call.1
$region0: #{tpu_custom_call.1}
  #allocation0 [shape = 'u32[]', space=smem, size = 0x4, offset = 0x4, fixed_abs, tag = 'smem constant byte address 0x4 - core index']
  #allocation1 [shape = 'u32[144,128]{1,0:T(1,128)}', space=vmem, size = 0x12000, scoped, tag = 'internal scratch']
  %s0 = inlined_call_operand.hbm [shape: f32[2,1024], index: 0, kind: input, shape index: {}]
  %s1 = inlined_call_operand.hbm [shape: f32[2,1024], index: 1, kind: output, shape index: {}]
  %s2 = sld [smem:[#allocation0]]
  $region18: #{tpu_custom_call.1} parent=0
    _
  %s4 = ssub.s32 1, %s2
  %s5 = scalar_select 0, %s4, %s2
  $region1: #{tpu_custom_call.1} parent=0
    #allocation2 [shape = 'u8[8192]{0}', space=vmem, size = 0x2000, scoped, tag = 'input window, operand 0, single buffered']
    #allocation3 [shape = 's32[1]{0}', space=sflag, size = 0x4, scoped, tag = 'scoped memory for tpu_custom_call.1']
    #allocation4 [shape = 's32[1]{0}', space=sflag, size = 0x4, scoped, tag = 'scoped memory for tpu_custom_call.1']
    #allocation5 [shape = 'u8[8192]{0}', space=vmem, size = 0x2000, scoped, tag = 'output window, operand 0, single buffered']
    %6 = vsyncpa [#allocation3], 0
    %7 = vsyncpa [#allocation4], 0
    // Predicated region
    $region2: #{tpu_custom_call.1} parent=1 // pred_check
      _
    $region3: #{tpu_custom_call.1} parent=1 // pred_check_branch
      %9 = sbr.rel (0) target = $region5
    $region4: #{tpu_custom_call.1} parent=1 // pred_region
      %s11 = ssub.s32 256, 256
      %12 = vsyncadd [#allocation3], %s11
      %s14 = sshll.u32 [#allocation2], 4
      %s15 = int_to_ptr.vmem [resolvable:$true] %s14
      %17 = dma.hbm_to_vmem [thread:$0]  %s0, 256, %s15, [#allocation3]
    $region5: #{tpu_custom_call.1} parent=1 // pred_fallthru
      _
    // Predicated region
    $region6: #{tpu_custom_call.1} parent=1 // pred_check
      _
    $region7: #{tpu_custom_call.1} parent=1 // pred_check_branch
      %19 = sbr.rel (0) target = $region9
    $region8: #{tpu_custom_call.1} parent=1 // pred_region
      %20 = dma.done [#allocation3], 256
    $region9: #{tpu_custom_call.1} parent=1 // pred_fallthru
      _
    %v21 = vld [vmem:[#allocation2] sm:$0xff]
    %v22 = vld [vmem:[#allocation2 + $0x8] sm:$0xff]
    %v23 = vmax.f32 %v21, 0.0
    %v24 = vmax.f32 %v22, 0.0
    %v25 = vmin.f32 %v23, 1.0
    %v26 = vmin.f32 %v24, 1.0
    %27 = vst [vmem:[#allocation5] sm:$0xff] %v25
    %28 = vst [vmem:[#allocation5 + $0x8] sm:$0xff] %v26
    // Predicated region
    $region10: #{tpu_custom_call.1} parent=1 // pred_check
      _
    $region11: #{tpu_custom_call.1} parent=1 // pred_check_branch
      %30 = sbr.rel (0) target = $region13
    $region12: #{tpu_custom_call.1} parent=1 // pred_region
      %s32 = ssub.s32 256, 256
      %33 = vsyncadd [#allocation4], %s32
      %s35 = sshll.u32 [#allocation5], 4
      %s36 = int_to_ptr.vmem [resolvable:$true] %s35
      %38 = dma.vmem_to_hbm [thread:$0]  %s36, 256, %s1, [#allocation4]
    $region13: #{tpu_custom_call.1} parent=1 // pred_fallthru
      _
    // Predicated region
    $region14: #{tpu_custom_call.1} parent=1 // pred_check
      _
    $region15: #{tpu_custom_call.1} parent=1 // pred_check_branch
      %40 = sbr.rel (0) target = $region17
    $region16: #{tpu_custom_call.1} parent=1 // pred_region
      %41 = dma.done [#allocation4], 256
    $region17: #{tpu_custom_call.1} parent=1 // pred_fallthru
      _
    %42 = vsyncpa [#allocation3], 1
    %43 = vsyncpa [#allocation4], 1

</llo_original>
